<compile_context>
chip_gen: v6e
topology: v6e:2x2x1
jax: 0.10.0
libtpu: 0.0.40
codegen_flags: <defaults>
</compile_context>

<pallas_src>
import functools

import jax
import jax.numpy as jnp
from jax import lax
from jax.experimental import pallas as pl
from jax.experimental.pallas import tpu as pltpu


# ---------------------------------------------------------------------------
# Pallas kernels
# ---------------------------------------------------------------------------

def _conv_gemm_kernel(p_ref, w_ref, b_ref, o_ref):
    """One conv layer as an im2col GEMM: o = relu(patches @ W + b)."""
    acc = jnp.dot(p_ref[...], w_ref[...], preferred_element_type=jnp.float32)
    acc = acc + b_ref[...]                       # b is [1, C_out], VPU broadcast
    o_ref[...] = jnp.maximum(acc, 0.0).astype(o_ref.dtype)


def _mlp_head_kernel(x_ref, w1_ref, b1_ref, w2_ref, b2_ref, o_ref):
    """Fused 2-layer MLP head: o = relu(x @ W1 + b1) @ W2 + b2."""
    h = jnp.dot(x_ref[...], w1_ref[...], preferred_element_type=jnp.float32) + b1_ref[...]
    h = jnp.maximum(h, 0.0)
    o = jnp.dot(h, w2_ref[...], preferred_element_type=jnp.float32) + b2_ref[...]
    o_ref[...] = o.astype(o_ref.dtype)


# Whole arrays live in VMEM; no grid, no pipelining needed at these sizes.
_VMEM_SPEC = pl.BlockSpec(memory_space=pltpu.MemorySpace.VMEM)


# ---------------------------------------------------------------------------
# Wrapper-side layout helpers (pure data movement, no FLOPs)
# ---------------------------------------------------------------------------

def _conv_out_hw(h, w, k, s, p):
    return (h + 2 * p - k) // s + 1, (w + 2 * p - k) // s + 1


def _im2col(x_nhwc, kh, kw, stride, padding):
    """[N,H,W,C] -> ([N*Ho*Wo, kh*kw*C], Ho, Wo). K ordered (dy, dx, c_in)."""
    n, h, w, c = x_nhwc.shape
    ho = (h + 2 * padding - kh) // stride + 1
    wo = (w + 2 * padding - kw) // stride + 1
    xp = jnp.pad(x_nhwc, ((0, 0), (padding, padding), (padding, padding), (0, 0)))
    cols = []
    for dy in range(kh):
        for dx in range(kw):
            cols.append(xp[:, dy:dy + stride * ho:stride, dx:dx + stride * wo:stride, :])
    patches = jnp.concatenate(cols, axis=-1)          # [N, Ho, Wo, kh*kw*C]
    return patches.reshape(n * ho * wo, kh * kw * c), ho, wo


# ---------------------------------------------------------------------------
# Forward pass
# ---------------------------------------------------------------------------

def encoder_forward(observation, params, *, strides, paddings):
    """Pallas forward for EncoderModel: returns (latent c, conv features)."""
    lead_dim = observation.ndim - 3
    assert lead_dim in (0, 1, 2)
    if lead_dim == 2:
        t, b = observation.shape[:2]
    elif lead_dim == 1:
        t, b = 1, observation.shape[0]
    else:
        t, b = 1, 1
    n = t * b
    img_shape = observation.shape[lead_dim:]

    img = observation
    if img.dtype == jnp.uint8:
        img = img.astype(jnp.float32) * (1.0 / 255.0)
    img = img.astype(jnp.float32)

    x = img.reshape((n,) + tuple(img_shape))          # [N, C, H, W]
    x = jnp.transpose(x, (0, 2, 3, 1))                # NHWC (channels on lanes)

    # Conv stack: each layer = one Pallas GEMM (+bias+ReLU) over im2col patches.
    for (wgt, bias), stride, padding in zip(params["conv"], strides, paddings):
        c_out, c_in, kh, kw = wgt.shape
        patches, ho, wo = _im2col(x, kh, kw, stride, padding)
        # [C_out, C_in, KH, KW] -> [KH*KW*C_in, C_out] to match patch K order.
        w_mat = jnp.transpose(wgt, (2, 3, 1, 0)).reshape(kh * kw * c_in, c_out)
        y = pl.pallas_call(
            _conv_gemm_kernel,
            out_shape=jax.ShapeDtypeStruct((patches.shape[0], c_out), jnp.float32),
            in_specs=[_VMEM_SPEC, _VMEM_SPEC, _VMEM_SPEC],
            out_specs=_VMEM_SPEC,
        )(patches, w_mat, bias)
        x = y.reshape(n, ho, wo, c_out)

    conv_out = jnp.transpose(x, (0, 3, 1, 2))         # NCHW, as PyTorch returns
    flat = conv_out.reshape(n, -1)                    # == conv.view(T*B, -1)

    w1, b1, w2, b2 = params["head"]
    c = pl.pallas_call(
        _mlp_head_kernel,
        out_shape=jax.ShapeDtypeStruct((n, w2.shape[1]), jnp.float32),
        in_specs=[_VMEM_SPEC] * 5,
        out_specs=_VMEM_SPEC,
    )(flat, w1, b1, w2, b2)

    # restore_leading_dims
    if lead_dim == 2:
        c = c.reshape((t, b) + c.shape[1:])
        conv_out = conv_out.reshape((t, b) + conv_out.shape[1:])
    elif lead_dim == 0:
        c, conv_out = c[0], conv_out[0]
    return c, conv_out


# ---------------------------------------------------------------------------
# Parameter init (Kaiming-like; weights stored as [in, out] for x @ W)
# ---------------------------------------------------------------------------

def init_params(key, image_shape, channels, kernel_sizes, strides, paddings,
                hidden_sizes, latent_size):
    assert len(hidden_sizes) == 1, "fused head kernel assumes one hidden layer"
    c_in, h, w = image_shape
    keys = jax.random.split(key, 2 * len(channels) + 4)
    conv = []
    idx = 0
    for c_out, k, s, p in zip(channels, kernel_sizes, strides, paddings):
        fan_in = c_in * k * k
        wgt = jax.random.normal(keys[idx], (c_out, c_in, k, k), jnp.float32) \
            * jnp.sqrt(2.0 / fan_in)
        b = 0.1 * jax.random.normal(keys[idx + 1], (1, c_out), jnp.float32)
        conv.append((wgt, b))
        idx += 2
        c_in = c_out
        h, w = _conv_out_hw(h, w, k, s, p)
    feat = h * w * c_in
    hd = hidden_sizes[0]
    w1 = jax.random.normal(keys[idx], (feat, hd), jnp.float32) * jnp.sqrt(2.0 / feat)
    b1 = 0.1 * jax.random.normal(keys[idx + 1], (1, hd), jnp.float32)
    w2 = jax.random.normal(keys[idx + 2], (hd, latent_size), jnp.float32) \
        * jnp.sqrt(1.0 / hd)
    b2 = 0.1 * jax.random.normal(keys[idx + 3], (1, latent_size), jnp.float32)
    return {"conv": conv, "head": (w1, b1, w2, b2)}


# ---------------------------------------------------------------------------
# Pure-JAX reference (XLA conv at HIGHEST precision) for sanity checking
# ---------------------------------------------------------------------------

def _reference(observation, params, strides, paddings):
    lead_dim = observation.ndim - 3
    if lead_dim == 2:
        tb = observation.shape[0] * observation.shape[1]
    elif lead_dim == 1:
        tb = observation.shape[0]
    else:
        tb = 1
    img = observation
    if img.dtype == jnp.uint8:
        img = img.astype(jnp.float32) * (1.0 / 255.0)
    x = img.astype(jnp.float32).reshape((tb,) + observation.shape[lead_dim:])
    for (wgt, b), s, p in zip(params["conv"], strides, paddings):
        x = lax.conv_general_dilated(
            x, wgt, window_strides=(s, s), padding=[(p, p), (p, p)],
            dimension_numbers=("NCHW", "OIHW", "NCHW"),
            precision=lax.Precision.HIGHEST)
        x = jnp.maximum(x + b.reshape(1, -1, 1, 1), 0.0)
    conv_out = x
    flat = x.reshape(tb, -1)
    w1, b1, w2, b2 = params["head"]
    hid = jnp.maximum(jnp.dot(flat, w1, precision=lax.Precision.HIGHEST) + b1, 0.0)
    c = jnp.dot(hid, w2, precision=lax.Precision.HIGHEST) + b2
    if lead_dim == 2:
        t, bd = observation.shape[:2]
        c = c.reshape((t, bd) + c.shape[1:])
        conv_out = conv_out.reshape((t, bd) + conv_out.shape[1:])
    elif lead_dim == 0:
        c, conv_out = c[0], conv_out[0]
    return c, conv_out


if __name__ == "__main__":
    # Small EncoderModel config: image (3,16,16), conv channels [16,32],
    # kernels [5,3], strides [2,2], paddings [2,1], head [64] -> latent 32.
    B = 4
    image_shape = (3, 16, 16)
    channels, kernel_sizes = [16, 32], [5, 3]
    strides, paddings = [2, 2], [2, 1]
    hidden_sizes, latent_size = [64], 32

    key = jax.random.PRNGKey(0)
    k_obs, k_par = jax.random.split(key)
    # rlpyt-style uint8 image observations (exercises the *1/255 branch).
    observation = jax.random.randint(
        k_obs, (B,) + image_shape, 0, 256, dtype=jnp.int32).astype(jnp.uint8)
    params = init_params(k_par, image_shape, channels, kernel_sizes, strides,
                         paddings, hidden_sizes, latent_size)

    fwd = jax.jit(functools.partial(encoder_forward,
                                    strides=tuple(strides),
                                    paddings=tuple(paddings)))
    c, conv = fwd(observation, params)
    jax.block_until_ready((c, conv))

    # Expected output shapes.
    h, w = image_shape[1], image_shape[2]
    for k_, s_, p_ in zip(kernel_sizes, strides, paddings):
        h, w = _conv_out_hw(h, w, k_, s_, p_)
    assert c.shape == (B, latent_size), c.shape
    assert conv.shape == (B, channels[-1], h, w), conv.shape

    # Numeric check vs pure-JAX reference.  Tolerance accommodates differing
    # f32 accumulation orders between the MXU GEMMs and XLA's direct conv.
    c_ref, conv_ref = _reference(observation, params, strides, paddings)
    assert jnp.allclose(conv, conv_ref, atol=2e-2, rtol=2e-2), \
        float(jnp.max(jnp.abs(conv - conv_ref)))
    assert jnp.allclose(c, c_ref, atol=2e-2, rtol=2e-2), \
        float(jnp.max(jnp.abs(c - c_ref)))

    print("KERNEL_OK")
</pallas_src>

<mosaic_0001>
module attributes {stable_mosaic.version = 11 : i64} {
  func.func @_conv_gemm_kernel(%arg0: memref<256x75xf32, #tpu.memory_space<vmem>>, %arg1: memref<75x16xf32, #tpu.memory_space<vmem>>, %arg2: memref<1x16xf32, #tpu.memory_space<vmem>>, %arg3: memref<256x16xf32, #tpu.memory_space<vmem>>) attributes {dimension_semantics = [], scalar_prefetch = 0 : i64, scratch_operands = 0 : i64, tpu.core_type = #tpu.core_type<tc>} {
    %c0 = arith.constant 0 : index
    %c0_0 = arith.constant 0 : index
    %0 = vector.load %arg0[%c0, %c0_0] : memref<256x75xf32, #tpu.memory_space<vmem>>, vector<256x75xf32>
    %c0_1 = arith.constant 0 : index
    %c0_2 = arith.constant 0 : index
    %1 = vector.load %arg1[%c0_1, %c0_2] : memref<75x16xf32, #tpu.memory_space<vmem>>, vector<75x16xf32>
    %cst = arith.constant dense<0.000000e+00> : vector<256x16xf32>
    %2 = tpu.matmul %0, %1, %cst {dimension_numbers = #tpu.dot_dimension_numbers<[1], [0], [0], [1], [0, 0, 1, 1], [], []>} : vector<256x75xf32>, vector<75x16xf32>, vector<256x16xf32> -> vector<256x16xf32>
    %c0_3 = arith.constant 0 : index
    %c0_4 = arith.constant 0 : index
    %3 = vector.load %arg2[%c0_3, %c0_4] : memref<1x16xf32, #tpu.memory_space<vmem>>, vector<1x16xf32>
    %4 = vector.broadcast %3 : vector<1x16xf32> to vector<256x16xf32>
    %5 = arith.addf %2, %4 : vector<256x16xf32>
    %cst_5 = arith.constant 0.000000e+00 : f32
    %6 = vector.broadcast %cst_5 : f32 to vector<256x16xf32>
    %7 = arith.maximumf %5, %6 : vector<256x16xf32>
    %c0_6 = arith.constant 0 : index
    %c0_7 = arith.constant 0 : index
    %8 = vector.load %arg3[%c0_6, %c0_7] : memref<256x16xf32, #tpu.memory_space<vmem>>, vector<256x16xf32>
    tpu.vector_store %arg3[%c0_6, %c0_7], %7 {strides = array<i32>} : memref<256x16xf32, #tpu.memory_space<vmem>>, vector<256x16xf32>,
    return
  }
}

module attributes {stable_mosaic.version = 11 : i64} {
  func.func @_conv_gemm_kernel(%arg0: memref<64x144xf32, #tpu.memory_space<vmem>>, %arg1: memref<144x32xf32, #tpu.memory_space<vmem>>, %arg2: memref<1x32xf32, #tpu.memory_space<vmem>>, %arg3: memref<64x32xf32, #tpu.memory_space<vmem>>) attributes {dimension_semantics = [], scalar_prefetch = 0 : i64, scratch_operands = 0 : i64, tpu.core_type = #tpu.core_type<tc>} {
    %c0 = arith.constant 0 : index
    %c0_0 = arith.constant 0 : index
    %0 = vector.load %arg0[%c0, %c0_0] : memref<64x144xf32, #tpu.memory_space<vmem>>, vector<64x144xf32>
    %c0_1 = arith.constant 0 : index
    %c0_2 = arith.constant 0 : index
    %1 = vector.load %arg1[%c0_1, %c0_2] : memref<144x32xf32, #tpu.memory_space<vmem>>, vector<144x32xf32>
    %cst = arith.constant dense<0.000000e+00> : vector<64x32xf32>
    %2 = tpu.matmul %0, %1, %cst {dimension_numbers = #tpu.dot_dimension_numbers<[1], [0], [0], [1], [0, 0, 1, 1], [], []>} : vector<64x144xf32>, vector<144x32xf32>, vector<64x32xf32> -> vector<64x32xf32>
    %c0_3 = arith.constant 0 : index
    %c0_4 = arith.constant 0 : index
    %3 = vector.load %arg2[%c0_3, %c0_4] : memref<1x32xf32, #tpu.memory_space<vmem>>, vector<1x32xf32>
    %4 = vector.broadcast %3 : vector<1x32xf32> to vector<64x32xf32>
    %5 = arith.addf %2, %4 : vector<64x32xf32>
    %cst_5 = arith.constant 0.000000e+00 : f32
    %6 = vector.broadcast %cst_5 : f32 to vector<64x32xf32>
    %7 = arith.maximumf %5, %6 : vector<64x32xf32>
    %c0_6 = arith.constant 0 : index
    %c0_7 = arith.constant 0 : index
    %8 = vector.load %arg3[%c0_6, %c0_7] : memref<64x32xf32, #tpu.memory_space<vmem>>, vector<64x32xf32>
    tpu.vector_store %arg3[%c0_6, %c0_7], %7 {strides = array<i32>} : memref<64x32xf32, #tpu.memory_space<vmem>>, vector<64x32xf32>,
    return
  }
}

module attributes {stable_mosaic.version = 11 : i64} {
  func.func @_mlp_head_kernel(%arg0: memref<4x512xf32, #tpu.memory_space<vmem>>, %arg1: memref<512x64xf32, #tpu.memory_space<vmem>>, %arg2: memref<1x64xf32, #tpu.memory_space<vmem>>, %arg3: memref<64x32xf32, #tpu.memory_space<vmem>>, %arg4: memref<1x32xf32, #tpu.memory_space<vmem>>, %arg5: memref<4x32xf32, #tpu.memory_space<vmem>>) attributes {dimension_semantics = [], scalar_prefetch = 0 : i64, scratch_operands = 0 : i64, tpu.core_type = #tpu.core_type<tc>} {
    %c0 = arith.constant 0 : index
    %c0_0 = arith.constant 0 : index
    %0 = vector.load %arg0[%c0, %c0_0] : memref<4x512xf32, #tpu.memory_space<vmem>>, vector<4x512xf32>
    %c0_1 = arith.constant 0 : index
    %c0_2 = arith.constant 0 : index
    %1 = vector.load %arg1[%c0_1, %c0_2] : memref<512x64xf32, #tpu.memory_space<vmem>>, vector<512x64xf32>
    %cst = arith.constant dense<0.000000e+00> : vector<4x64xf32>
    %2 = tpu.matmul %0, %1, %cst {dimension_numbers = #tpu.dot_dimension_numbers<[1], [0], [0], [1], [0, 0, 1, 1], [], []>} : vector<4x512xf32>, vector<512x64xf32>, vector<4x64xf32> -> vector<4x64xf32>
    %c0_3 = arith.constant 0 : index
    %c0_4 = arith.constant 0 : index
    %3 = vector.load %arg2[%c0_3, %c0_4] : memref<1x64xf32, #tpu.memory_space<vmem>>, vector<1x64xf32>
    %4 = vector.broadcast %3 : vector<1x64xf32> to vector<4x64xf32>
    %5 = arith.addf %2, %4 : vector<4x64xf32>
    %cst_5 = arith.constant 0.000000e+00 : f32
    %6 = vector.broadcast %cst_5 : f32 to vector<4x64xf32>
    %7 = arith.maximumf %5, %6 : vector<4x64xf32>
    %c0_6 = arith.constant 0 : index
    %c0_7 = arith.constant 0 : index
    %8 = vector.load %arg3[%c0_6, %c0_7] : memref<64x32xf32, #tpu.memory_space<vmem>>, vector<64x32xf32>
    %cst_8 = arith.constant dense<0.000000e+00> : vector<4x32xf32>
    %9 = tpu.matmul %7, %8, %cst_8 {dimension_numbers = #tpu.dot_dimension_numbers<[1], [0], [0], [1], [0, 0, 1, 1], [], []>} : vector<4x64xf32>, vector<64x32xf32>, vector<4x32xf32> -> vector<4x32xf32>
    %c0_9 = arith.constant 0 : index
    %c0_10 = arith.constant 0 : index
    %10 = vector.load %arg4[%c0_9, %c0_10] : memref<1x32xf32, #tpu.memory_space<vmem>>, vector<1x32xf32>
    %11 = vector.broadcast %10 : vector<1x32xf32> to vector<4x32xf32>
    %12 = arith.addf %9, %11 : vector<4x32xf32>
    %c0_11 = arith.constant 0 : index
    %c0_12 = arith.constant 0 : index
    %13 = vector.load %arg5[%c0_11, %c0_12] : memref<4x32xf32, #tpu.memory_space<vmem>>, vector<4x32xf32>
    tpu.vector_store %arg5[%c0_11, %c0_12], %12 {strides = array<i32>} : memref<4x32xf32, #tpu.memory_space<vmem>>, vector<4x32xf32>,
    return
  }
}

</mosaic_0001>

<llo_original>
// kernel: encoder_forward.3
$region0: #{encoder_forward.3}
  #allocation0 [shape = 'u32[]', space=smem, size = 0x4, offset = 0x4, fixed_abs, tag = 'smem constant byte address 0x4 - core index']
  #allocation1 [shape = 'u32[144,128]{1,0:T(1,128)}', space=vmem, size = 0x12000, scoped, tag = 'internal scratch']
  %s0 = inlined_call_operand.vmem [shape: f32[256,75], index: 0, kind: input, shape index: {}]
  %s1 = inlined_call_operand.vmem [shape: f32[75,16], index: 1, kind: input, shape index: {}]
  %s2 = inlined_call_operand.vmem [shape: f32[1,16], index: 2, kind: input, shape index: {}]
  %s3 = inlined_call_operand.vmem [shape: f32[256,16], index: 3, kind: output, shape index: {}]
  %s4 = sld [smem:[#allocation0]]
  $region22: #{encoder_forward.3} parent=0
    _
  %s6 = ssub.s32 1, %s4
  %s7 = scalar_select 0, %s6, %s4
  // Predicated region
  $region2: #{encoder_forward.3} parent=0 // pred_check
    _
  $region3: #{encoder_forward.3} parent=0 // pred_check_branch
    %9 = sbr.rel (0) target = $region5
  $region4: #{encoder_forward.3} parent=0 // pred_region
    _
  $region5: #{encoder_forward.3} parent=0 // pred_fallthru
    _
  // Predicated region
  $region6: #{encoder_forward.3} parent=0 // pred_check
    _
  $region7: #{encoder_forward.3} parent=0 // pred_check_branch
    %11 = sbr.rel (0) target = $region9
  $region8: #{encoder_forward.3} parent=0 // pred_region
    _
  $region9: #{encoder_forward.3} parent=0 // pred_fallthru
    _
  // Predicated region
  $region10: #{encoder_forward.3} parent=0 // pred_check
    _
  $region11: #{encoder_forward.3} parent=0 // pred_check_branch
    %13 = sbr.rel (0) target = $region13
  $region12: #{encoder_forward.3} parent=0 // pred_region
    _
  $region13: #{encoder_forward.3} parent=0 // pred_fallthru
    _
  %v14 = vld [vmem:[%s0] sm:$0xff]
  %v15 = vld [vmem:[%s0 + $0x8] sm:$0xff]
  %v16 = vld [vmem:[%s0 + $0x10] sm:$0xff]
  %v17 = vld [vmem:[%s0 + $0x18] sm:$0xff]
  %v18 = vld [vmem:[%s0 + $0x20] sm:$0xff]
  %v19 = vld [vmem:[%s0 + $0x28] sm:$0xff]
  %v20 = vld [vmem:[%s0 + $0x30] sm:$0xff]
  %v21 = vld [vmem:[%s0 + $0x38] sm:$0xff]
  %v22 = vld [vmem:[%s0 + $0x40] sm:$0xff]
  %v23 = vld [vmem:[%s0 + $0x48] sm:$0xff]
  %v24 = vld [vmem:[%s0 + $0x50] sm:$0xff]
  %v25 = vld [vmem:[%s0 + $0x58] sm:$0xff]
  %v26 = vld [vmem:[%s0 + $0x60] sm:$0xff]
  %v27 = vld [vmem:[%s0 + $0x68] sm:$0xff]
  %v28 = vld [vmem:[%s0 + $0x70] sm:$0xff]
  %v29 = vld [vmem:[%s0 + $0x78] sm:$0xff]
  %v30 = vld [vmem:[%s0 + $0x80] sm:$0xff]
  %v31 = vld [vmem:[%s0 + $0x88] sm:$0xff]
  %v32 = vld [vmem:[%s0 + $0x90] sm:$0xff]
  %v33 = vld [vmem:[%s0 + $0x98] sm:$0xff]
  %v34 = vld [vmem:[%s0 + $0xa0] sm:$0xff]
  %v35 = vld [vmem:[%s0 + $0xa8] sm:$0xff]
  %v36 = vld [vmem:[%s0 + $0xb0] sm:$0xff]
  %v37 = vld [vmem:[%s0 + $0xb8] sm:$0xff]
  %v38 = vld [vmem:[%s0 + $0xc0] sm:$0xff]
  %v39 = vld [vmem:[%s0 + $0xc8] sm:$0xff]
  %v40 = vld [vmem:[%s0 + $0xd0] sm:$0xff]
  %v41 = vld [vmem:[%s0 + $0xd8] sm:$0xff]
  %v42 = vld [vmem:[%s0 + $0xe0] sm:$0xff]
  %v43 = vld [vmem:[%s0 + $0xe8] sm:$0xff]
  %v44 = vld [vmem:[%s0 + $0xf0] sm:$0xff]
  %v45 = vld [vmem:[%s0 + $0xf8] sm:$0xff]
  %v46 = vld [vmem:[%s1] sm:$0xff]
  %v47 = vld [vmem:[%s1 + $0x8] sm:$0xff]
  %v48 = vld [vmem:[%s1 + $0x10] sm:$0xff]
  %v49 = vld [vmem:[%s1 + $0x18] sm:$0xff]
  %v50 = vld [vmem:[%s1 + $0x20] sm:$0xff]
  %v51 = vld [vmem:[%s1 + $0x28] sm:$0xff]
  %v52 = vld [vmem:[%s1 + $0x30] sm:$0xff]
  %v53 = vld [vmem:[%s1 + $0x38] sm:$0xff]
  %v54 = vld [vmem:[%s1 + $0x40] sm:$0xff]
  %v55 = vld [vmem:[%s1 + $0x48] sm:$0x7]
  %v56 = vld [vmem:[%s2] sm:$0x1]
  %v58 = vlaneseq
  %v59 = vshrl.u32 %v58, 7
  %v60 = vsub.s32 0, %v59
  %v61 = vrot.slane %v56, %v60
  %vm63 = vcmask 613376
  %v65 = vsel %vm63, %v14, 0
  %v68 = vsel %vm63, %v15, 0
  %v71 = vsel %vm63, %v16, 0
  %v74 = vsel %vm63, %v17, 0
  %v77 = vsel %vm63, %v18, 0
  %v80 = vsel %vm63, %v19, 0
  %v83 = vsel %vm63, %v20, 0
  %v86 = vsel %vm63, %v21, 0
  %v89 = vsel %vm63, %v22, 0
  %v92 = vsel %vm63, %v23, 0
  %v95 = vsel %vm63, %v24, 0
  %v98 = vsel %vm63, %v25, 0
  %v101 = vsel %vm63, %v26, 0
  %v104 = vsel %vm63, %v27, 0
  %v107 = vsel %vm63, %v28, 0
  %v110 = vsel %vm63, %v29, 0
  %v113 = vsel %vm63, %v30, 0
  %v116 = vsel %vm63, %v31, 0
  %v119 = vsel %vm63, %v32, 0
  %v122 = vsel %vm63, %v33, 0
  %v125 = vsel %vm63, %v34, 0
  %v128 = vsel %vm63, %v35, 0
  %v131 = vsel %vm63, %v36, 0
  %v134 = vsel %vm63, %v37, 0
  %v137 = vsel %vm63, %v38, 0
  %v140 = vsel %vm63, %v39, 0
  %v143 = vsel %vm63, %v40, 0
  %v146 = vsel %vm63, %v41, 0
  %v149 = vsel %vm63, %v42, 0
  %v152 = vsel %vm63, %v43, 0
  %v155 = vsel %vm63, %v44, 0
  %v158 = vsel %vm63, %v45, 0
  %vm160 = vcmask 1042432
  %v162 = vsel %vm160, %v55, 0
  %164 = vmatprep.subr.mxu0 0.0
  %165 = vmatpush1.msra.mxu0 0.0
  %166 = vmatprep.subr.mxu0 0.0
  %167 = vmatpush1.msra.mxu0 0.0
  %168 = vmatprep.subr.mxu0 0.0
  %169 = vmatpush1.msra.mxu0 0.0
  %170 = vmatprep.subr.mxu0 0.0
  %171 = vmatpush1.msra.mxu0 0.0
  %172 = vmatprep.subr.mxu0 0.0
  %173 = vmatpush1.msra.mxu0 0.0
  %174 = vmatprep.subr.mxu0 0.0
  %175 = vmatpush1.msra.mxu0 0.0
  %176 = vmatprep.subr.mxu0 0.0
  %177 = vmatpush1.msra.mxu0 %v162
  %178 = vmatprep.subr.mxu0 0.0
  %179 = vmatpush1.msra.mxu0 %v54
  %180 = vmatprep.subr.mxu0 0.0
  %181 = vmatpush1.msra.mxu0 %v53
  %182 = vmatprep.subr.mxu0 0.0
  %183 = vmatpush1.msra.mxu0 %v52
  %184 = vmatprep.subr.mxu0 0.0
  %185 = vmatpush1.msra.mxu0 %v51
  %186 = vmatprep.subr.mxu0 0.0
  %187 = vmatpush1.msra.mxu0 %v50
  %188 = vmatprep.subr.mxu0 0.0
  %189 = vmatpush1.msra.mxu0 %v49
  %190 = vmatprep.subr.mxu0 0.0
  %191 = vmatpush1.msra.mxu0 %v48
  %192 = vmatprep.subr.mxu0 0.0
  %193 = vmatpush1.msra.mxu0 %v47
  %194 = vmatprep.subr.mxu0 0.0
  %195 = vmatpush1.msra.mxu0 %v46
  %196 = vmatprep.subr.mxu0 0.0
  %197 = vmatpush2.msra.mxu0 0.0
  %198 = vmatprep.subr.mxu0 0.0
  %199 = vmatpush2.msra.mxu0 0.0
  %200 = vmatprep.subr.mxu0 0.0
  %201 = vmatpush2.msra.mxu0 0.0
  %202 = vmatprep.subr.mxu0 0.0
  %203 = vmatpush2.msra.mxu0 0.0
  %204 = vmatprep.subr.mxu0 0.0
  %205 = vmatpush2.msra.mxu0 0.0
  %206 = vmatprep.subr.mxu0 0.0
  %207 = vmatpush2.msra.mxu0 0.0
  %208 = vmatprep.subr.mxu0 0.0
  %209 = vmatpush2.msra.mxu0 0.0
  %210 = vmatprep.subr.mxu0 0.0
  %211 = vmatpush2.msra.mxu0 0.0
  %212 = vmatprep.subr.mxu0 0.0
  %213 = vmatpush2.msra.mxu0 0.0
  %214 = vmatprep.subr.mxu0 0.0
  %215 = vmatpush2.msra.mxu0 0.0
  %216 = vmatprep.subr.mxu0 0.0
  %217 = vmatpush2.msra.mxu0 0.0
  %218 = vmatprep.subr.mxu0 0.0
  %219 = vmatpush2.msra.mxu0 0.0
  %220 = vmatprep.subr.mxu0 0.0
  %221 = vmatpush2.msra.mxu0 0.0
  %222 = vmatprep.subr.mxu0 0.0
  %223 = vmatpush2.msra.mxu0 0.0
  %224 = vmatprep.subr.mxu0 0.0
  %225 = vmatpush2.msra.mxu0 0.0
  %226 = vmatprep.subr.mxu0 0.0
  %227 = vmatpush2.msra.mxu0 0.0
  %228 = vmatprep.mubr.f32.mxu0 0.0
  %229 = vmatmul.mubr.f32.gmra.mxu0 %v65
  %v230 = vpop.f32.mrf.mxu0
  %v231 = vadd.f32 %v61, %v230
  %v232 = vpop.f32.mrf.mxu0
  %233 = vmatprep.mubr.f32.mxu0 0.0
  %234 = vmatmul.mubr.f32.gmra.mxu0 %v68
  %v235 = vpop.f32.mrf.mxu0
  %v236 = vadd.f32 %v61, %v235
  %v237 = vpop.f32.mrf.mxu0
  %238 = vmatprep.mubr.f32.mxu0 0.0
  %239 = vmatmul.mubr.f32.gmra.mxu0 %v71
  %v240 = vpop.f32.mrf.mxu0
  %v241 = vadd.f32 %v61, %v240
  %v242 = vpop.f32.mrf.mxu0
  %243 = vmatprep.mubr.f32.mxu0 0.0
  %244 = vmatmul.mubr.f32.gmra.mxu0 %v74
  %v245 = vpop.f32.mrf.mxu0
  %v246 = vadd.f32 %v61, %v245
  %v247 = vpop.f32.mrf.mxu0
  %248 = vmatprep.mubr.f32.mxu0 0.0
  %249 = vmatmul.mubr.f32.gmra.mxu0 %v77
  %v250 = vpop.f32.mrf.mxu0
  %v251 = vadd.f32 %v61, %v250
  %v252 = vpop.f32.mrf.mxu0
  %253 = vmatprep.mubr.f32.mxu0 0.0
  %254 = vmatmul.mubr.f32.gmra.mxu0 %v80
  %v255 = vpop.f32.mrf.mxu0
  %v256 = vadd.f32 %v61, %v255
  %v257 = vpop.f32.mrf.mxu0
  %258 = vmatprep.mubr.f32.mxu0 0.0
  %259 = vmatmul.mubr.f32.gmra.mxu0 %v83
  %v260 = vpop.f32.mrf.mxu0
  %v261 = vadd.f32 %v61, %v260
  %v262 = vpop.f32.mrf.mxu0
  %263 = vmatprep.mubr.f32.mxu0 0.0
  %264 = vmatmul.mubr.f32.gmra.mxu0 %v86
  %v265 = vpop.f32.mrf.mxu0
  %v266 = vadd.f32 %v61, %v265
  %v267 = vpop.f32.mrf.mxu0
  %268 = vmatprep.mubr.f32.mxu0 0.0
  %269 = vmatmul.mubr.f32.gmra.mxu0 %v89
  %v270 = vpop.f32.mrf.mxu0
  %v271 = vadd.f32 %v61, %v270
  %v272 = vpop.f32.mrf.mxu0
  %273 = vmatprep.mubr.f32.mxu0 0.0
  %274 = vmatmul.mubr.f32.gmra.mxu0 %v92
  %v275 = vpop.f32.mrf.mxu0
  %v276 = vadd.f32 %v61, %v275
  %v277 = vpop.f32.mrf.mxu0
  %278 = vmatprep.mubr.f32.mxu0 0.0
  %279 = vmatmul.mubr.f32.gmra.mxu0 %v95
  %v280 = vpop.f32.mrf.mxu0
  %v281 = vadd.f32 %v61, %v280
  %v282 = vpop.f32.mrf.mxu0
  %283 = vmatprep.mubr.f32.mxu0 0.0
  %284 = vmatmul.mubr.f32.gmra.mxu0 %v98
  %v285 = vpop.f32.mrf.mxu0
  %v286 = vadd.f32 %v61, %v285
  %v287 = vpop.f32.mrf.mxu0
  %288 = vmatprep.mubr.f32.mxu0 0.0
  %289 = vmatmul.mubr.f32.gmra.mxu0 %v101
  %v290 = vpop.f32.mrf.mxu0
  %v291 = vadd.f32 %v61, %v290
  %v292 = vpop.f32.mrf.mxu0
  %293 = vmatprep.mubr.f32.mxu0 0.0
  %294 = vmatmul.mubr.f32.gmra.mxu0 %v104
  %v295 = vpop.f32.mrf.mxu0
  %v296 = vadd.f32 %v61, %v295
  %v297 = vpop.f32.mrf.mxu0
  %298 = vmatprep.mubr.f32.mxu0 0.0
  %299 = vmatmul.mubr.f32.gmra.mxu0 %v107
  %v300 = vpop.f32.mrf.mxu0
  %v301 = vadd.f32 %v61, %v300
  %v302 = vpop.f32.mrf.mxu0
  %303 = vmatprep.mubr.f32.mxu0 0.0
  %304 = vmatmul.mubr.f32.gmra.mxu0 %v110
  %v305 = vpop.f32.mrf.mxu0
  %v306 = vadd.f32 %v61, %v305
  %v307 = vpop.f32.mrf.mxu0
  %308 = vmatprep.mubr.f32.mxu0 0.0
  %309 = vmatmul.mubr.f32.gmra.mxu0 %v113
  %v310 = vpop.f32.mrf.mxu0
  %v311 = vadd.f32 %v61, %v310
  %v312 = vpop.f32.mrf.mxu0
  %313 = vmatprep.mubr.f32.mxu0 0.0
  %314 = vmatmul.mubr.f32.gmra.mxu0 %v116
  %v315 = vpop.f32.mrf.mxu0
  %v316 = vadd.f32 %v61, %v315
  %v317 = vpop.f32.mrf.mxu0
  %318 = vmatprep.mubr.f32.mxu0 0.0
  %319 = vmatmul.mubr.f32.gmra.mxu0 %v119
  %v320 = vpop.f32.mrf.mxu0
  %v321 = vadd.f32 %v61, %v320
  %v322 = vpop.f32.mrf.mxu0
  %323 = vmatprep.mubr.f32.mxu0 0.0
  %324 = vmatmul.mubr.f32.gmra.mxu0 %v122
  %v325 = vpop.f32.mrf.mxu0
  %v326 = vadd.f32 %v61, %v325
  %v327 = vpop.f32.mrf.mxu0
  %328 = vmatprep.mubr.f32.mxu0 0.0
  %329 = vmatmul.mubr.f32.gmra.mxu0 %v125
  %v330 = vpop.f32.mrf.mxu0
  %v331 = vadd.f32 %v61, %v330
  %v332 = vpop.f32.mrf.mxu0
  %333 = vmatprep.mubr.f32.mxu0 0.0
  %334 = vmatmul.mubr.f32.gmra.mxu0 %v128
  %v335 = vpop.f32.mrf.mxu0
  %v336 = vadd.f32 %v61, %v335
  %v337 = vpop.f32.mrf.mxu0
  %338 = vmatprep.mubr.f32.mxu0 0.0
  %339 = vmatmul.mubr.f32.gmra.mxu0 %v131
  %v340 = vpop.f32.mrf.mxu0
  %v341 = vadd.f32 %v61, %v340
  %v342 = vpop.f32.mrf.mxu0
  %343 = vmatprep.mubr.f32.mxu0 0.0
  %344 = vmatmul.mubr.f32.gmra.mxu0 %v134
  %v345 = vpop.f32.mrf.mxu0
  %v346 = vadd.f32 %v61, %v345
  %v347 = vpop.f32.mrf.mxu0
  %348 = vmatprep.mubr.f32.mxu0 0.0
  %349 = vmatmul.mubr.f32.gmra.mxu0 %v137
  %v350 = vpop.f32.mrf.mxu0
  %v351 = vadd.f32 %v61, %v350
  %v352 = vpop.f32.mrf.mxu0
  %353 = vmatprep.mubr.f32.mxu0 0.0
  %354 = vmatmul.mubr.f32.gmra.mxu0 %v140
  %v355 = vpop.f32.mrf.mxu0
  %v356 = vadd.f32 %v61, %v355
  %v357 = vpop.f32.mrf.mxu0
  %358 = vmatprep.mubr.f32.mxu0 0.0
  %359 = vmatmul.mubr.f32.gmra.mxu0 %v143
  %v360 = vpop.f32.mrf.mxu0
  %v361 = vadd.f32 %v61, %v360
  %v362 = vpop.f32.mrf.mxu0
  %363 = vmatprep.mubr.f32.mxu0 0.0
  %364 = vmatmul.mubr.f32.gmra.mxu0 %v146
  %v365 = vpop.f32.mrf.mxu0
  %v366 = vadd.f32 %v61, %v365
  %v367 = vpop.f32.mrf.mxu0
  %368 = vmatprep.mubr.f32.mxu0 0.0
  %369 = vmatmul.mubr.f32.gmra.mxu0 %v149
  %v370 = vpop.f32.mrf.mxu0
  %v371 = vadd.f32 %v61, %v370
  %v372 = vpop.f32.mrf.mxu0
  %373 = vmatprep.mubr.f32.mxu0 0.0
  %374 = vmatmul.mubr.f32.gmra.mxu0 %v152
  %v375 = vpop.f32.mrf.mxu0
  %v376 = vadd.f32 %v61, %v375
  %v377 = vpop.f32.mrf.mxu0
  %378 = vmatprep.mubr.f32.mxu0 0.0
  %379 = vmatmul.mubr.f32.gmra.mxu0 %v155
  %v380 = vpop.f32.mrf.mxu0
  %v381 = vadd.f32 %v61, %v380
  %v382 = vpop.f32.mrf.mxu0
  %383 = vmatprep.mubr.f32.mxu0 0.0
  %384 = vmatmul.mubr.f32.gmra.mxu0 %v158
  %v385 = vpop.f32.mrf.mxu0
  %v386 = vadd.f32 %v61, %v385
  %v387 = vpop.f32.mrf.mxu0
  %388 = vdwg.mxu0
  %v389 = vmax.f32 %v231, 0.0
  %v390 = vmax.f32 %v236, 0.0
  %v391 = vmax.f32 %v241, 0.0
  %v392 = vmax.f32 %v246, 0.0
  %v393 = vmax.f32 %v251, 0.0
  %v394 = vmax.f32 %v256, 0.0
  %v395 = vmax.f32 %v261, 0.0
  %v396 = vmax.f32 %v266, 0.0
  %v397 = vmax.f32 %v271, 0.0
  %v398 = vmax.f32 %v276, 0.0
  %v399 = vmax.f32 %v281, 0.0
  %v400 = vmax.f32 %v286, 0.0
  %v401 = vmax.f32 %v291, 0.0
  %v402 = vmax.f32 %v296, 0.0
  %v403 = vmax.f32 %v301, 0.0
  %v404 = vmax.f32 %v306, 0.0
  %v405 = vmax.f32 %v311, 0.0
  %v406 = vmax.f32 %v316, 0.0
  %v407 = vmax.f32 %v321, 0.0
  %v408 = vmax.f32 %v326, 0.0
  %v409 = vmax.f32 %v331, 0.0
  %v410 = vmax.f32 %v336, 0.0
  %v411 = vmax.f32 %v341, 0.0
  %v412 = vmax.f32 %v346, 0.0
  %v413 = vmax.f32 %v351, 0.0
  %v414 = vmax.f32 %v356, 0.0
  %v415 = vmax.f32 %v361, 0.0
  %v416 = vmax.f32 %v366, 0.0
  %v417 = vmax.f32 %v371, 0.0
  %v418 = vmax.f32 %v376, 0.0
  %v419 = vmax.f32 %v381, 0.0
  %v420 = vmax.f32 %v386, 0.0
  %vm421 = vcmask 130048
  %422 = vst.msk [vmem:[%s3] sm:$0xff] %vm421, %v389
  %423 = vst.msk [vmem:[%s3 + $0x8] sm:$0xff] %vm421, %v390
  %424 = vst.msk [vmem:[%s3 + $0x10] sm:$0xff] %vm421, %v391
  %425 = vst.msk [vmem:[%s3 + $0x18] sm:$0xff] %vm421, %v392
  %426 = vst.msk [vmem:[%s3 + $0x20] sm:$0xff] %vm421, %v393
  %427 = vst.msk [vmem:[%s3 + $0x28] sm:$0xff] %vm421, %v394
  %428 = vst.msk [vmem:[%s3 + $0x30] sm:$0xff] %vm421, %v395
  %429 = vst.msk [vmem:[%s3 + $0x38] sm:$0xff] %vm421, %v396
  %430 = vst.msk [vmem:[%s3 + $0x40] sm:$0xff] %vm421, %v397
  %431 = vst.msk [vmem:[%s3 + $0x48] sm:$0xff] %vm421, %v398
  %432 = vst.msk [vmem:[%s3 + $0x50] sm:$0xff] %vm421, %v399
  %433 = vst.msk [vmem:[%s3 + $0x58] sm:$0xff] %vm421, %v400
  %434 = vst.msk [vmem:[%s3 + $0x60] sm:$0xff] %vm421, %v401
  %435 = vst.msk [vmem:[%s3 + $0x68] sm:$0xff] %vm421, %v402
  %436 = vst.msk [vmem:[%s3 + $0x70] sm:$0xff] %vm421, %v403
  %437 = vst.msk [vmem:[%s3 + $0x78] sm:$0xff] %vm421, %v404
  %438 = vst.msk [vmem:[%s3 + $0x80] sm:$0xff] %vm421, %v405
  %439 = vst.msk [vmem:[%s3 + $0x88] sm:$0xff] %vm421, %v406
  %440 = vst.msk [vmem:[%s3 + $0x90] sm:$0xff] %vm421, %v407
  %441 = vst.msk [vmem:[%s3 + $0x98] sm:$0xff] %vm421, %v408
  %442 = vst.msk [vmem:[%s3 + $0xa0] sm:$0xff] %vm421, %v409
  %443 = vst.msk [vmem:[%s3 + $0xa8] sm:$0xff] %vm421, %v410
  %444 = vst.msk [vmem:[%s3 + $0xb0] sm:$0xff] %vm421, %v411
  %445 = vst.msk [vmem:[%s3 + $0xb8] sm:$0xff] %vm421, %v412
  %446 = vst.msk [vmem:[%s3 + $0xc0] sm:$0xff] %vm421, %v413
  %447 = vst.msk [vmem:[%s3 + $0xc8] sm:$0xff] %vm421, %v414
  %448 = vst.msk [vmem:[%s3 + $0xd0] sm:$0xff] %vm421, %v415
  %449 = vst.msk [vmem:[%s3 + $0xd8] sm:$0xff] %vm421, %v416
  %450 = vst.msk [vmem:[%s3 + $0xe0] sm:$0xff] %vm421, %v417
  %451 = vst.msk [vmem:[%s3 + $0xe8] sm:$0xff] %vm421, %v418
  %452 = vst.msk [vmem:[%s3 + $0xf0] sm:$0xff] %vm421, %v419
  %453 = vst.msk [vmem:[%s3 + $0xf8] sm:$0xff] %vm421, %v420
  // Predicated region
  $region14: #{encoder_forward.3} parent=0 // pred_check
    _
  $region15: #{encoder_forward.3} parent=0 // pred_check_branch
    %455 = sbr.rel (0) target = $region17
  $region16: #{encoder_forward.3} parent=0 // pred_region
    _
  $region17: #{encoder_forward.3} parent=0 // pred_fallthru
    _
  // Predicated region
  $region18: #{encoder_forward.3} parent=0 // pred_check
    _
  $region19: #{encoder_forward.3} parent=0 // pred_check_branch
    %457 = sbr.rel (0) target = $region21
  $region20: #{encoder_forward.3} parent=0 // pred_region
    _
  $region21: #{encoder_forward.3} parent=0 // pred_fallthru
    _

// kernel: encoder_forward.4
$region0: #{encoder_forward.4}
  #allocation0 [shape = 'u32[]', space=smem, size = 0x4, offset = 0x4, fixed_abs, tag = 'smem constant byte address 0x4 - core index']
  #allocation1 [shape = 'u32[144,128]{1,0:T(1,128)}', space=vmem, size = 0x12000, scoped, tag = 'internal scratch']
  %s0 = inlined_call_operand.vmem [shape: f32[64,144], index: 0, kind: input, shape index: {}]
  %s1 = inlined_call_operand.vmem [shape: f32[144,32], index: 1, kind: input, shape index: {}]
  %s2 = inlined_call_operand.vmem [shape: f32[1,32], index: 2, kind: input, shape index: {}]
  %s3 = inlined_call_operand.vmem [shape: f32[64,32], index: 3, kind: output, shape index: {}]
  %s4 = sld [smem:[#allocation0]]
  $region22: #{encoder_forward.4} parent=0
    _
  %s6 = ssub.s32 1, %s4
  %s7 = scalar_select 0, %s6, %s4
  // Predicated region
  $region2: #{encoder_forward.4} parent=0 // pred_check
    _
  $region3: #{encoder_forward.4} parent=0 // pred_check_branch
    %9 = sbr.rel (0) target = $region5
  $region4: #{encoder_forward.4} parent=0 // pred_region
    _
  $region5: #{encoder_forward.4} parent=0 // pred_fallthru
    _
  // Predicated region
  $region6: #{encoder_forward.4} parent=0 // pred_check
    _
  $region7: #{encoder_forward.4} parent=0 // pred_check_branch
    %11 = sbr.rel (0) target = $region9
  $region8: #{encoder_forward.4} parent=0 // pred_region
    _
  $region9: #{encoder_forward.4} parent=0 // pred_fallthru
    _
  // Predicated region
  $region10: #{encoder_forward.4} parent=0 // pred_check
    _
  $region11: #{encoder_forward.4} parent=0 // pred_check_branch
    %13 = sbr.rel (0) target = $region13
  $region12: #{encoder_forward.4} parent=0 // pred_region
    _
  $region13: #{encoder_forward.4} parent=0 // pred_fallthru
    _
  %v14 = vld [vmem:[%s0] sm:$0xff]
  %v15 = vld [vmem:[%s0 + $0x8] sm:$0xff]
  %v16 = vld [vmem:[%s0 + $0x10] sm:$0xff]
  %v17 = vld [vmem:[%s0 + $0x18] sm:$0xff]
  %v18 = vld [vmem:[%s0 + $0x20] sm:$0xff]
  %v19 = vld [vmem:[%s0 + $0x28] sm:$0xff]
  %v20 = vld [vmem:[%s0 + $0x30] sm:$0xff]
  %v21 = vld [vmem:[%s0 + $0x38] sm:$0xff]
  %v22 = vld [vmem:[%s0 + $0x40] sm:$0xff]
  %v23 = vld [vmem:[%s0 + $0x48] sm:$0xff]
  %v24 = vld [vmem:[%s0 + $0x50] sm:$0xff]
  %v25 = vld [vmem:[%s0 + $0x58] sm:$0xff]
  %v26 = vld [vmem:[%s0 + $0x60] sm:$0xff]
  %v27 = vld [vmem:[%s0 + $0x68] sm:$0xff]
  %v28 = vld [vmem:[%s0 + $0x70] sm:$0xff]
  %v29 = vld [vmem:[%s0 + $0x78] sm:$0xff]
  %v30 = vld [vmem:[%s1] sm:$0xff]
  %v31 = vld [vmem:[%s1 + $0x8] sm:$0xff]
  %v32 = vld [vmem:[%s1 + $0x10] sm:$0xff]
  %v33 = vld [vmem:[%s1 + $0x18] sm:$0xff]
  %v34 = vld [vmem:[%s1 + $0x20] sm:$0xff]
  %v35 = vld [vmem:[%s1 + $0x28] sm:$0xff]
  %v36 = vld [vmem:[%s1 + $0x30] sm:$0xff]
  %v37 = vld [vmem:[%s1 + $0x38] sm:$0xff]
  %v38 = vld [vmem:[%s1 + $0x40] sm:$0xff]
  %v39 = vld [vmem:[%s1 + $0x48] sm:$0xff]
  %v40 = vld [vmem:[%s1 + $0x50] sm:$0xff]
  %v41 = vld [vmem:[%s1 + $0x58] sm:$0xff]
  %v42 = vld [vmem:[%s1 + $0x60] sm:$0xff]
  %v43 = vld [vmem:[%s1 + $0x68] sm:$0xff]
  %v44 = vld [vmem:[%s1 + $0x70] sm:$0xff]
  %v45 = vld [vmem:[%s1 + $0x78] sm:$0xff]
  %v46 = vld [vmem:[%s1 + $0x80] sm:$0xff]
  %v47 = vld [vmem:[%s1 + $0x88] sm:$0xff]
  %v48 = vld [vmem:[%s2] sm:$0x1]
  %v50 = vlaneseq
  %v51 = vshrl.u32 %v50, 7
  %v52 = vsub.s32 0, %v51
  %v53 = vrot.slane %v48, %v52
  %vm55 = vcmask 130048
  %v57 = vsel %vm55, %v15, 0
  %v60 = vsel %vm55, %v17, 0
  %v63 = vsel %vm55, %v19, 0
  %v66 = vsel %vm55, %v21, 0
  %v69 = vsel %vm55, %v23, 0
  %v72 = vsel %vm55, %v25, 0
  %v75 = vsel %vm55, %v27, 0
  %v78 = vsel %vm55, %v29, 0
  %80 = vmatprep.subr.mxu0 0.0
  %81 = vmatpush1.msra.mxu0 %v45
  %82 = vmatprep.subr.mxu0 0.0
  %83 = vmatpush1.msra.mxu0 %v44
  %84 = vmatprep.subr.mxu0 0.0
  %85 = vmatpush1.msra.mxu0 %v43
  %86 = vmatprep.subr.mxu0 0.0
  %87 = vmatpush1.msra.mxu0 %v42
  %88 = vmatprep.subr.mxu0 0.0
  %89 = vmatpush1.msra.mxu0 %v41
  %90 = vmatprep.subr.mxu0 0.0
  %91 = vmatpush1.msra.mxu0 %v40
  %92 = vmatprep.subr.mxu0 0.0
  %93 = vmatpush1.msra.mxu0 %v39
  %94 = vmatprep.subr.mxu0 0.0
  %95 = vmatpush1.msra.mxu0 %v38
  %96 = vmatprep.subr.mxu0 0.0
  %97 = vmatpush1.msra.mxu0 %v37
  %98 = vmatprep.subr.mxu0 0.0
  %99 = vmatpush1.msra.mxu0 %v36
  %100 = vmatprep.subr.mxu0 0.0
  %101 = vmatpush1.msra.mxu0 %v35
  %102 = vmatprep.subr.mxu0 0.0
  %103 = vmatpush1.msra.mxu0 %v34
  %104 = vmatprep.subr.mxu0 0.0
  %105 = vmatpush1.msra.mxu0 %v33
  %106 = vmatprep.subr.mxu0 0.0
  %107 = vmatpush1.msra.mxu0 %v32
  %108 = vmatprep.subr.mxu0 0.0
  %109 = vmatpush1.msra.mxu0 %v31
  %110 = vmatprep.subr.mxu0 0.0
  %111 = vmatpush1.msra.mxu0 %v30
  %112 = vmatprep.subr.mxu0 0.0
  %113 = vmatpush2.msra.mxu0 0.0
  %114 = vmatprep.subr.mxu0 0.0
  %115 = vmatpush2.msra.mxu0 0.0
  %116 = vmatprep.subr.mxu0 0.0
  %117 = vmatpush2.msra.mxu0 0.0
  %118 = vmatprep.subr.mxu0 0.0
  %119 = vmatpush2.msra.mxu0 0.0
  %120 = vmatprep.subr.mxu0 0.0
  %121 = vmatpush2.msra.mxu0 0.0
  %122 = vmatprep.subr.mxu0 0.0
  %123 = vmatpush2.msra.mxu0 0.0
  %124 = vmatprep.subr.mxu0 0.0
  %125 = vmatpush2.msra.mxu0 0.0
  %126 = vmatprep.subr.mxu0 0.0
  %127 = vmatpush2.msra.mxu0 0.0
  %128 = vmatprep.subr.mxu0 0.0
  %129 = vmatpush2.msra.mxu0 0.0
  %130 = vmatprep.subr.mxu0 0.0
  %131 = vmatpush2.msra.mxu0 0.0
  %132 = vmatprep.subr.mxu0 0.0
  %133 = vmatpush2.msra.mxu0 0.0
  %134 = vmatprep.subr.mxu0 0.0
  %135 = vmatpush2.msra.mxu0 0.0
  %136 = vmatprep.subr.mxu0 0.0
  %137 = vmatpush2.msra.mxu0 0.0
  %138 = vmatprep.subr.mxu0 0.0
  %139 = vmatpush2.msra.mxu0 0.0
  %140 = vmatprep.subr.mxu0 0.0
  %141 = vmatpush2.msra.mxu0 %v47
  %142 = vmatprep.subr.mxu0 0.0
  %143 = vmatpush2.msra.mxu0 %v46
  %144 = vmatprep.mubr.f32.mxu0 %v57
  %145 = vmatmul.mubr.f32.gmra.mxu0 %v14
  %v146 = vpop.f32.mrf.mxu0
  %v147 = vadd.f32 %v53, %v146
  %v148 = vpop.f32.mrf.mxu0
  %149 = vmatprep.mubr.f32.mxu0 %v60
  %150 = vmatmul.mubr.f32.gmra.mxu0 %v16
  %v151 = vpop.f32.mrf.mxu0
  %v152 = vadd.f32 %v53, %v151
  %v153 = vpop.f32.mrf.mxu0
  %154 = vmatprep.mubr.f32.mxu0 %v63
  %155 = vmatmul.mubr.f32.gmra.mxu0 %v18
  %v156 = vpop.f32.mrf.mxu0
  %v157 = vadd.f32 %v53, %v156
  %v158 = vpop.f32.mrf.mxu0
  %159 = vmatprep.mubr.f32.mxu0 %v66
  %160 = vmatmul.mubr.f32.gmra.mxu0 %v20
  %v161 = vpop.f32.mrf.mxu0
  %v162 = vadd.f32 %v53, %v161
  %v163 = vpop.f32.mrf.mxu0
  %164 = vmatprep.mubr.f32.mxu0 %v69
  %165 = vmatmul.mubr.f32.gmra.mxu0 %v22
  %v166 = vpop.f32.mrf.mxu0
  %v167 = vadd.f32 %v53, %v166
  %v168 = vpop.f32.mrf.mxu0
  %169 = vmatprep.mubr.f32.mxu0 %v72
  %170 = vmatmul.mubr.f32.gmra.mxu0 %v24
  %v171 = vpop.f32.mrf.mxu0
  %v172 = vadd.f32 %v53, %v171
  %v173 = vpop.f32.mrf.mxu0
  %174 = vmatprep.mubr.f32.mxu0 %v75
  %175 = vmatmul.mubr.f32.gmra.mxu0 %v26
  %v176 = vpop.f32.mrf.mxu0
  %v177 = vadd.f32 %v53, %v176
  %v178 = vpop.f32.mrf.mxu0
  %179 = vmatprep.mubr.f32.mxu0 %v78
  %180 = vmatmul.mubr.f32.gmra.mxu0 %v28
  %v181 = vpop.f32.mrf.mxu0
  %v182 = vadd.f32 %v53, %v181
  %v183 = vpop.f32.mrf.mxu0
  %184 = vdwg.mxu0
  %v185 = vmax.f32 %v147, 0.0
  %v186 = vmax.f32 %v152, 0.0
  %v187 = vmax.f32 %v157, 0.0
  %v188 = vmax.f32 %v162, 0.0
  %v189 = vmax.f32 %v167, 0.0
  %v190 = vmax.f32 %v172, 0.0
  %v191 = vmax.f32 %v177, 0.0
  %v192 = vmax.f32 %v182, 0.0
  %vm193 = vcmask 261120
  %194 = vst.msk [vmem:[%s3] sm:$0xff] %vm193, %v185
  %195 = vst.msk [vmem:[%s3 + $0x8] sm:$0xff] %vm193, %v186
  %196 = vst.msk [vmem:[%s3 + $0x10] sm:$0xff] %vm193, %v187
  %197 = vst.msk [vmem:[%s3 + $0x18] sm:$0xff] %vm193, %v188
  %198 = vst.msk [vmem:[%s3 + $0x20] sm:$0xff] %vm193, %v189
  %199 = vst.msk [vmem:[%s3 + $0x28] sm:$0xff] %vm193, %v190
  %200 = vst.msk [vmem:[%s3 + $0x30] sm:$0xff] %vm193, %v191
  %201 = vst.msk [vmem:[%s3 + $0x38] sm:$0xff] %vm193, %v192
  // Predicated region
  $region14: #{encoder_forward.4} parent=0 // pred_check
    _
  $region15: #{encoder_forward.4} parent=0 // pred_check_branch
    %203 = sbr.rel (0) target = $region17
  $region16: #{encoder_forward.4} parent=0 // pred_region
    _
  $region17: #{encoder_forward.4} parent=0 // pred_fallthru
    _
  // Predicated region
  $region18: #{encoder_forward.4} parent=0 // pred_check
    _
  $region19: #{encoder_forward.4} parent=0 // pred_check_branch
    %205 = sbr.rel (0) target = $region21
  $region20: #{encoder_forward.4} parent=0 // pred_region
    _
  $region21: #{encoder_forward.4} parent=0 // pred_fallthru
    _

// kernel: encoder_forward.5
$region0: #{encoder_forward.5}
  #allocation0 [shape = 'u32[]', space=smem, size = 0x4, offset = 0x4, fixed_abs, tag = 'smem constant byte address 0x4 - core index']
  #allocation1 [shape = 'u32[144,128]{1,0:T(1,128)}', space=vmem, size = 0x12000, scoped, tag = 'internal scratch']
  %s0 = inlined_call_operand.vmem [shape: f32[4,512], index: 0, kind: input, shape index: {}]
  %s1 = inlined_call_operand.vmem [shape: f32[512,64], index: 1, kind: input, shape index: {}]
  %s2 = inlined_call_operand.vmem [shape: f32[1,64], index: 2, kind: input, shape index: {}]
  %s3 = inlined_call_operand.vmem [shape: f32[64,32], index: 3, kind: input, shape index: {}]
  %s4 = inlined_call_operand.vmem [shape: f32[1,32], index: 4, kind: input, shape index: {}]
  %s5 = inlined_call_operand.hbm [shape: f32[4,32], index: 5, kind: output, shape index: {}]
  %s6 = sld [smem:[#allocation0]]
  $region30: #{encoder_forward.5} parent=0
    _
  %s8 = ssub.s32 1, %s6
  %s9 = scalar_select 0, %s8, %s6
  $region1: #{encoder_forward.5} parent=0
    #allocation2 [shape = 'u8[2048]{0}', space=vmem, size = 0x800, scoped, tag = 'output window, operand 0, single buffered']
    #allocation3 [shape = 's32[1]{0}', space=sflag, size = 0x4, scoped, tag = 'scoped memory for encoder_forward.5']
    %10 = vsyncpa [#allocation3], 0
    // Predicated region
    $region2: #{encoder_forward.5} parent=1 // pred_check
      _
    $region3: #{encoder_forward.5} parent=1 // pred_check_branch
      %12 = sbr.rel (0) target = $region5
    $region4: #{encoder_forward.5} parent=1 // pred_region
      _
    $region5: #{encoder_forward.5} parent=1 // pred_fallthru
      _
    // Predicated region
    $region6: #{encoder_forward.5} parent=1 // pred_check
      _
    $region7: #{encoder_forward.5} parent=1 // pred_check_branch
      %14 = sbr.rel (0) target = $region9
    $region8: #{encoder_forward.5} parent=1 // pred_region
      _
    $region9: #{encoder_forward.5} parent=1 // pred_fallthru
      _
    // Predicated region
    $region10: #{encoder_forward.5} parent=1 // pred_check
      _
    $region11: #{encoder_forward.5} parent=1 // pred_check_branch
      %16 = sbr.rel (0) target = $region13
    $region12: #{encoder_forward.5} parent=1 // pred_region
      _
    $region13: #{encoder_forward.5} parent=1 // pred_fallthru
      _
    // Predicated region
    $region14: #{encoder_forward.5} parent=1 // pred_check
      _
    $region15: #{encoder_forward.5} parent=1 // pred_check_branch
      %18 = sbr.rel (0) target = $region17
    $region16: #{encoder_forward.5} parent=1 // pred_region
      _
    $region17: #{encoder_forward.5} parent=1 // pred_fallthru
      _
    // Predicated region
    $region18: #{encoder_forward.5} parent=1 // pred_check
      _
    $region19: #{encoder_forward.5} parent=1 // pred_check_branch
      %20 = sbr.rel (0) target = $region21
    $region20: #{encoder_forward.5} parent=1 // pred_region
      _
    $region21: #{encoder_forward.5} parent=1 // pred_fallthru
      _
    %v21 = vld [vmem:[%s0] sm:$0xff]
    %v22 = vld [vmem:[%s0 + $0x8] sm:$0xff]
    %v23 = vld [vmem:[%s1] sm:$0xff]
    %v24 = vld [vmem:[%s1 + $0x8] sm:$0xff]
    %v25 = vld [vmem:[%s1 + $0x10] sm:$0xff]
    %v26 = vld [vmem:[%s1 + $0x18] sm:$0xff]
    %v27 = vld [vmem:[%s1 + $0x20] sm:$0xff]
    %v28 = vld [vmem:[%s1 + $0x28] sm:$0xff]
    %v29 = vld [vmem:[%s1 + $0x30] sm:$0xff]
    %v30 = vld [vmem:[%s1 + $0x38] sm:$0xff]
    %v31 = vld [vmem:[%s1 + $0x40] sm:$0xff]
    %v32 = vld [vmem:[%s1 + $0x48] sm:$0xff]
    %v33 = vld [vmem:[%s1 + $0x50] sm:$0xff]
    %v34 = vld [vmem:[%s1 + $0x58] sm:$0xff]
    %v35 = vld [vmem:[%s1 + $0x60] sm:$0xff]
    %v36 = vld [vmem:[%s1 + $0x68] sm:$0xff]
    %v37 = vld [vmem:[%s1 + $0x70] sm:$0xff]
    %v38 = vld [vmem:[%s1 + $0x78] sm:$0xff]
    %v39 = vld [vmem:[%s1 + $0x80] sm:$0xff]
    %v40 = vld [vmem:[%s1 + $0x88] sm:$0xff]
    %v41 = vld [vmem:[%s1 + $0x90] sm:$0xff]
    %v42 = vld [vmem:[%s1 + $0x98] sm:$0xff]
    %v43 = vld [vmem:[%s1 + $0xa0] sm:$0xff]
    %v44 = vld [vmem:[%s1 + $0xa8] sm:$0xff]
    %v45 = vld [vmem:[%s1 + $0xb0] sm:$0xff]
    %v46 = vld [vmem:[%s1 + $0xb8] sm:$0xff]
    %v47 = vld [vmem:[%s1 + $0xc0] sm:$0xff]
    %v48 = vld [vmem:[%s1 + $0xc8] sm:$0xff]
    %v49 = vld [vmem:[%s1 + $0xd0] sm:$0xff]
    %v50 = vld [vmem:[%s1 + $0xd8] sm:$0xff]
    %v51 = vld [vmem:[%s1 + $0xe0] sm:$0xff]
    %v52 = vld [vmem:[%s1 + $0xe8] sm:$0xff]
    %v53 = vld [vmem:[%s1 + $0xf0] sm:$0xff]
    %v54 = vld [vmem:[%s1 + $0xf8] sm:$0xff]
    %v55 = vld [vmem:[%s1 + $0x100] sm:$0xff]
    %v56 = vld [vmem:[%s1 + $0x108] sm:$0xff]
    %v57 = vld [vmem:[%s1 + $0x110] sm:$0xff]
    %v58 = vld [vmem:[%s1 + $0x118] sm:$0xff]
    %v59 = vld [vmem:[%s1 + $0x120] sm:$0xff]
    %v60 = vld [vmem:[%s1 + $0x128] sm:$0xff]
    %v61 = vld [vmem:[%s1 + $0x130] sm:$0xff]
    %v62 = vld [vmem:[%s1 + $0x138] sm:$0xff]
    %v63 = vld [vmem:[%s1 + $0x140] sm:$0xff]
    %v64 = vld [vmem:[%s1 + $0x148] sm:$0xff]
    %v65 = vld [vmem:[%s1 + $0x150] sm:$0xff]
    %v66 = vld [vmem:[%s1 + $0x158] sm:$0xff]
    %v67 = vld [vmem:[%s1 + $0x160] sm:$0xff]
    %v68 = vld [vmem:[%s1 + $0x168] sm:$0xff]
    %v69 = vld [vmem:[%s1 + $0x170] sm:$0xff]
    %v70 = vld [vmem:[%s1 + $0x178] sm:$0xff]
    %v71 = vld [vmem:[%s1 + $0x180] sm:$0xff]
    %v72 = vld [vmem:[%s1 + $0x188] sm:$0xff]
    %v73 = vld [vmem:[%s1 + $0x190] sm:$0xff]
    %v74 = vld [vmem:[%s1 + $0x198] sm:$0xff]
    %v75 = vld [vmem:[%s1 + $0x1a0] sm:$0xff]
    %v76 = vld [vmem:[%s1 + $0x1a8] sm:$0xff]
    %v77 = vld [vmem:[%s1 + $0x1b0] sm:$0xff]
    %v78 = vld [vmem:[%s1 + $0x1b8] sm:$0xff]
    %v79 = vld [vmem:[%s1 + $0x1c0] sm:$0xff]
    %v80 = vld [vmem:[%s1 + $0x1c8] sm:$0xff]
    %v81 = vld [vmem:[%s1 + $0x1d0] sm:$0xff]
    %v82 = vld [vmem:[%s1 + $0x1d8] sm:$0xff]
    %v83 = vld [vmem:[%s1 + $0x1e0] sm:$0xff]
    %v84 = vld [vmem:[%s1 + $0x1e8] sm:$0xff]
    %v85 = vld [vmem:[%s1 + $0x1f0] sm:$0xff]
    %v86 = vld [vmem:[%s1 + $0x1f8] sm:$0xff]
    %v87 = vld [vmem:[%s2] sm:$0x1]
    %v89 = vlaneseq
    %v90 = vshrl.u32 %v89, 7
    %v91 = vsub.s32 0, %v90
    %v92 = vrot.slane %v87, %v91
    %v96 = vcombine.high %v21, %v21
    %v97 = vcombine.high %v22, %v22
    %100 = vmatprep.subr.mxu0 0.0
    %101 = vmatpush1.msra.mxu0 %v38
    %102 = vmatprep.subr.mxu0 0.0
    %103 = vmatpush1.msra.mxu0 %v37
    %104 = vmatprep.subr.mxu0 0.0
    %105 = vmatpush1.msra.mxu0 %v36
    %106 = vmatprep.subr.mxu0 0.0
    %107 = vmatpush1.msra.mxu0 %v35
    %108 = vmatprep.subr.mxu0 0.0
    %109 = vmatpush1.msra.mxu0 %v34
    %110 = vmatprep.subr.mxu0 0.0
    %111 = vmatpush1.msra.mxu0 %v33
    %112 = vmatprep.subr.mxu0 0.0
    %113 = vmatpush1.msra.mxu0 %v32
    %114 = vmatprep.subr.mxu0 0.0
    %115 = vmatpush1.msra.mxu0 %v31
    %116 = vmatprep.subr.mxu0 0.0
    %117 = vmatpush1.msra.mxu0 %v30
    %118 = vmatprep.subr.mxu0 0.0
    %119 = vmatpush1.msra.mxu0 %v29
    %120 = vmatprep.subr.mxu0 0.0
    %121 = vmatpush1.msra.mxu0 %v28
    %122 = vmatprep.subr.mxu0 0.0
    %123 = vmatpush1.msra.mxu0 %v27
    %124 = vmatprep.subr.mxu0 0.0
    %125 = vmatpush1.msra.mxu0 %v26
    %126 = vmatprep.subr.mxu0 0.0
    %127 = vmatpush1.msra.mxu0 %v25
    %128 = vmatprep.subr.mxu0 0.0
    %129 = vmatpush1.msra.mxu0 %v24
    %130 = vmatprep.subr.mxu0 0.0
    %131 = vmatpush1.msra.mxu0 %v23
    %132 = vmatprep.subr.mxu0 0.0
    %133 = vmatpush2.msra.mxu0 %v54
    %134 = vmatprep.subr.mxu0 0.0
    %135 = vmatpush2.msra.mxu0 %v53
    %136 = vmatprep.subr.mxu0 0.0
    %137 = vmatpush2.msra.mxu0 %v52
    %138 = vmatprep.subr.mxu0 0.0
    %139 = vmatpush2.msra.mxu0 %v51
    %140 = vmatprep.subr.mxu0 0.0
    %141 = vmatpush2.msra.mxu0 %v50
    %142 = vmatprep.subr.mxu0 0.0
    %143 = vmatpush2.msra.mxu0 %v49
    %144 = vmatprep.subr.mxu0 0.0
    %145 = vmatpush2.msra.mxu0 %v48
    %146 = vmatprep.subr.mxu0 0.0
    %147 = vmatpush2.msra.mxu0 %v47
    %148 = vmatprep.subr.mxu0 0.0
    %149 = vmatpush2.msra.mxu0 %v46
    %150 = vmatprep.subr.mxu0 0.0
    %151 = vmatpush2.msra.mxu0 %v45
    %152 = vmatprep.subr.mxu0 0.0
    %153 = vmatpush2.msra.mxu0 %v44
    %154 = vmatprep.subr.mxu0 0.0
    %155 = vmatpush2.msra.mxu0 %v43
    %156 = vmatprep.subr.mxu0 0.0
    %157 = vmatpush2.msra.mxu0 %v42
    %158 = vmatprep.subr.mxu0 0.0
    %159 = vmatpush2.msra.mxu0 %v41
    %160 = vmatprep.subr.mxu0 0.0
    %161 = vmatpush2.msra.mxu0 %v40
    %162 = vmatprep.subr.mxu0 0.0
    %163 = vmatpush2.msra.mxu0 %v39
    %164 = vmatprep.mubr.f32.mxu0 %v96
    %165 = vmatmul.mubr.f32.gmra.mxu0 %v21
    %v166 = vpop.f32.mrf.mxu0
    %v167 = vadd.f32 %v92, %v166
    %v168 = vpop.f32.mrf.mxu0
    %169 = vdwg.mxu0
    %170 = vmatprep.subr.mxu0 0.0
    %171 = vmatpush1.msra.mxu0 %v70
    %172 = vmatprep.subr.mxu0 0.0
    %173 = vmatpush1.msra.mxu0 %v69
    %174 = vmatprep.subr.mxu0 0.0
    %175 = vmatpush1.msra.mxu0 %v68
    %176 = vmatprep.subr.mxu0 0.0
    %177 = vmatpush1.msra.mxu0 %v67
    %178 = vmatprep.subr.mxu0 0.0
    %179 = vmatpush1.msra.mxu0 %v66
    %180 = vmatprep.subr.mxu0 0.0
    %181 = vmatpush1.msra.mxu0 %v65
    %182 = vmatprep.subr.mxu0 0.0
    %183 = vmatpush1.msra.mxu0 %v64
    %184 = vmatprep.subr.mxu0 0.0
    %185 = vmatpush1.msra.mxu0 %v63
    %186 = vmatprep.subr.mxu0 0.0
    %187 = vmatpush1.msra.mxu0 %v62
    %188 = vmatprep.subr.mxu0 0.0
    %189 = vmatpush1.msra.mxu0 %v61
    %190 = vmatprep.subr.mxu0 0.0
    %191 = vmatpush1.msra.mxu0 %v60
    %192 = vmatprep.subr.mxu0 0.0
    %193 = vmatpush1.msra.mxu0 %v59
    %194 = vmatprep.subr.mxu0 0.0
    %195 = vmatpush1.msra.mxu0 %v58
    %196 = vmatprep.subr.mxu0 0.0
    %197 = vmatpush1.msra.mxu0 %v57
    %198 = vmatprep.subr.mxu0 0.0
    %199 = vmatpush1.msra.mxu0 %v56
    %200 = vmatprep.subr.mxu0 0.0
    %201 = vmatpush1.msra.mxu0 %v55
    %202 = vmatprep.subr.mxu0 0.0
    %203 = vmatpush2.msra.mxu0 %v86
    %204 = vmatprep.subr.mxu0 0.0
    %205 = vmatpush2.msra.mxu0 %v85
    %206 = vmatprep.subr.mxu0 0.0
    %207 = vmatpush2.msra.mxu0 %v84
    %208 = vmatprep.subr.mxu0 0.0
    %209 = vmatpush2.msra.mxu0 %v83
    %210 = vmatprep.subr.mxu0 0.0
    %211 = vmatpush2.msra.mxu0 %v82
    %212 = vmatprep.subr.mxu0 0.0
    %213 = vmatpush2.msra.mxu0 %v81
    %214 = vmatprep.subr.mxu0 0.0
    %215 = vmatpush2.msra.mxu0 %v80
    %216 = vmatprep.subr.mxu0 0.0
    %217 = vmatpush2.msra.mxu0 %v79
    %218 = vmatprep.subr.mxu0 0.0
    %219 = vmatpush2.msra.mxu0 %v78
    %220 = vmatprep.subr.mxu0 0.0
    %221 = vmatpush2.msra.mxu0 %v77
    %222 = vmatprep.subr.mxu0 0.0
    %223 = vmatpush2.msra.mxu0 %v76
    %224 = vmatprep.subr.mxu0 0.0
    %225 = vmatpush2.msra.mxu0 %v75
    %226 = vmatprep.subr.mxu0 0.0
    %227 = vmatpush2.msra.mxu0 %v74
    %228 = vmatprep.subr.mxu0 0.0
    %229 = vmatpush2.msra.mxu0 %v73
    %230 = vmatprep.subr.mxu0 0.0
    %231 = vmatpush2.msra.mxu0 %v72
    %232 = vmatprep.subr.mxu0 0.0
    %233 = vmatpush2.msra.mxu0 %v71
    %234 = vmatprep.mubr.f32.mxu0 %v97
    %235 = vmatmul.mubr.f32.gmra.mxu0 %v22
    %v236 = vpop.f32.mrf.mxu0
    %v237 = vadd.f32 %v167, %v236
    %v238 = vpop.f32.mrf.mxu0
    %239 = vdwg.mxu0
    %v240 = vmax.f32 %v237, 0.0
    %v241 = vld [vmem:[%s3] sm:$0xff]
    %v242 = vld [vmem:[%s3 + $0x8] sm:$0xff]
    %v243 = vld [vmem:[%s3 + $0x10] sm:$0xff]
    %v244 = vld [vmem:[%s3 + $0x18] sm:$0xff]
    %v245 = vld [vmem:[%s3 + $0x20] sm:$0xff]
    %v246 = vld [vmem:[%s3 + $0x28] sm:$0xff]
    %v247 = vld [vmem:[%s3 + $0x30] sm:$0xff]
    %v248 = vld [vmem:[%s3 + $0x38] sm:$0xff]
    %v249 = vld [vmem:[%s4] sm:$0x1]
    %v251 = vlaneseq
    %v252 = vshrl.u32 %v251, 7
    %v253 = vsub.s32 0, %v252
    %v254 = vrot.slane %v249, %v253
    %vm256 = vcmask 523264
    %v258 = vsel %vm256, %v240, 0
    %260 = vmatprep.subr.mxu0 0.0
    %261 = vmatpush1.msra.mxu0 0.0
    %262 = vmatprep.subr.mxu0 0.0
    %263 = vmatpush1.msra.mxu0 0.0
    %264 = vmatprep.subr.mxu0 0.0
    %265 = vmatpush1.msra.mxu0 0.0
    %266 = vmatprep.subr.mxu0 0.0
    %267 = vmatpush1.msra.mxu0 0.0
    %268 = vmatprep.subr.mxu0 0.0
    %269 = vmatpush1.msra.mxu0 0.0
    %270 = vmatprep.subr.mxu0 0.0
    %271 = vmatpush1.msra.mxu0 0.0
    %272 = vmatprep.subr.mxu0 0.0
    %273 = vmatpush1.msra.mxu0 0.0
    %274 = vmatprep.subr.mxu0 0.0
    %275 = vmatpush1.msra.mxu0 0.0
    %276 = vmatprep.subr.mxu0 0.0
    %277 = vmatpush1.msra.mxu0 %v248
    %278 = vmatprep.subr.mxu0 0.0
    %279 = vmatpush1.msra.mxu0 %v247
    %280 = vmatprep.subr.mxu0 0.0
    %281 = vmatpush1.msra.mxu0 %v246
    %282 = vmatprep.subr.mxu0 0.0
    %283 = vmatpush1.msra.mxu0 %v245
    %284 = vmatprep.subr.mxu0 0.0
    %285 = vmatpush1.msra.mxu0 %v244
    %286 = vmatprep.subr.mxu0 0.0
    %287 = vmatpush1.msra.mxu0 %v243
    %288 = vmatprep.subr.mxu0 0.0
    %289 = vmatpush1.msra.mxu0 %v242
    %290 = vmatprep.subr.mxu0 0.0
    %291 = vmatpush1.msra.mxu0 %v241
    %292 = vmatprep.subr.mxu0 0.0
    %293 = vmatpush2.msra.mxu0 0.0
    %294 = vmatprep.subr.mxu0 0.0
    %295 = vmatpush2.msra.mxu0 0.0
    %296 = vmatprep.subr.mxu0 0.0
    %297 = vmatpush2.msra.mxu0 0.0
    %298 = vmatprep.subr.mxu0 0.0
    %299 = vmatpush2.msra.mxu0 0.0
    %300 = vmatprep.subr.mxu0 0.0
    %301 = vmatpush2.msra.mxu0 0.0
    %302 = vmatprep.subr.mxu0 0.0
    %303 = vmatpush2.msra.mxu0 0.0
    %304 = vmatprep.subr.mxu0 0.0
    %305 = vmatpush2.msra.mxu0 0.0
    %306 = vmatprep.subr.mxu0 0.0
    %307 = vmatpush2.msra.mxu0 0.0
    %308 = vmatprep.subr.mxu0 0.0
    %309 = vmatpush2.msra.mxu0 0.0
    %310 = vmatprep.subr.mxu0 0.0
    %311 = vmatpush2.msra.mxu0 0.0
    %312 = vmatprep.subr.mxu0 0.0
    %313 = vmatpush2.msra.mxu0 0.0
    %314 = vmatprep.subr.mxu0 0.0
    %315 = vmatpush2.msra.mxu0 0.0
    %316 = vmatprep.subr.mxu0 0.0
    %317 = vmatpush2.msra.mxu0 0.0
    %318 = vmatprep.subr.mxu0 0.0
    %319 = vmatpush2.msra.mxu0 0.0
    %320 = vmatprep.subr.mxu0 0.0
    %321 = vmatpush2.msra.mxu0 0.0
    %322 = vmatprep.subr.mxu0 0.0
    %323 = vmatpush2.msra.mxu0 0.0
    %324 = vmatprep.mubr.f32.mxu0 0.0
    %325 = vmatmul.mubr.f32.gmra.mxu0 %v258
    %v326 = vpop.f32.mrf.mxu0
    %v327 = vadd.f32 %v254, %v326
    %v328 = vpop.f32.mrf.mxu0
    %329 = vdwg.mxu0
    %vm330 = vcmask 257024
    %331 = vst.msk [vmem:[#allocation2] sm:$0xf] %vm330, %v327
    // Predicated region
    $region22: #{encoder_forward.5} parent=1 // pred_check
      _
    $region23: #{encoder_forward.5} parent=1 // pred_check_branch
      %333 = sbr.rel (0) target = $region25
    $region24: #{encoder_forward.5} parent=1 // pred_region
      %s335 = ssub.s32 64, 64
      %336 = vsyncadd [#allocation3], %s335
      %s338 = sshll.u32 [#allocation2], 4
      %s339 = int_to_ptr.vmem [resolvable:$true] %s338
      %341 = dma.vmem_to_hbm [thread:$0]  %s339, 64, %s5, [#allocation3]
    $region25: #{encoder_forward.5} parent=1 // pred_fallthru
      _
    // Predicated region
    $region26: #{encoder_forward.5} parent=1 // pred_check
      _
    $region27: #{encoder_forward.5} parent=1 // pred_check_branch
      %343 = sbr.rel (0) target = $region29
    $region28: #{encoder_forward.5} parent=1 // pred_region
      %344 = dma.done [#allocation3], 64
    $region29: #{encoder_forward.5} parent=1 // pred_fallthru
      _
    %345 = vsyncpa [#allocation3], 1

</llo_original>
